<compile_context>
chip_gen: v5e
topology: v5e:2x2
jax: 0.10.0
libtpu: 0.0.40
codegen_flags: <defaults>
</compile_context>

<pallas_src>
import functools

import jax
import jax.numpy as jnp
from jax.experimental import pallas as pl
from jax.experimental.pallas import tpu as pltpu

NUM_BLOCKS = 5
BN_EPS = 1e-5


# ---------------------------------------------------------------------------
# Kernel
# ---------------------------------------------------------------------------
def _resnet_kernel(x_ref, w0_ref, wblk_ref, vec_ref, out_ref, *,
                   num_blocks, hidden, out_dim):
    relu = lambda v: jnp.maximum(v, 0.0)

    def bn(y, g_row, b_row):
        # Train-mode BatchNorm1d fused into one scale + one shift.
        g = vec_ref[g_row:g_row + 1, :]
        b = vec_ref[b_row:b_row + 1, :]
        mean = jnp.mean(y, axis=0, keepdims=True)
        var = jnp.mean((y - mean) ** 2, axis=0, keepdims=True)
        scale = g * jax.lax.rsqrt(var + BN_EPS)          # rsqrt -> EUP slot
        return y * scale + (b - mean * scale)

    x = x_ref[...]

    # input_layer: Linear (bias cancelled by BN) -> BN -> ReLU
    h = jnp.dot(x, w0_ref[...], preferred_element_type=jnp.float32)
    h = relu(bn(h, 0, 1))

    r_g1 = 2
    r_be1 = 2 + num_blocks
    r_g2 = 2 + 2 * num_blocks
    r_be2 = 2 + 3 * num_blocks

    # residual blocks: act(block(x) + x), shortcut = Identity (in == out dim)
    for i in range(num_blocks):                      # Python-unrolled on purpose
        c = i * 2 * hidden
        y = jnp.dot(h, wblk_ref[:, c:c + hidden],
                    preferred_element_type=jnp.float32)
        y = relu(bn(y, r_g1 + i, r_be1 + i))
        y = jnp.dot(y, wblk_ref[:, c + hidden:c + 2 * hidden],
                    preferred_element_type=jnp.float32)
        y = bn(y, r_g2 + i, r_be2 + i)
        h = relu(y + h)

    # output_layer: tiny N=out_dim projection on VPU/XLU (no MXU push for N=1)
    r_wout = 2 + 4 * num_blocks
    r_bout = r_wout + out_dim
    cols = [
        jnp.sum(h * vec_ref[r_wout + j:r_wout + j + 1, :], axis=-1, keepdims=True)
        for j in range(out_dim)
    ]
    out = cols[0] if out_dim == 1 else jnp.concatenate(cols, axis=-1)
    out_ref[...] = out + vec_ref[r_bout:r_bout + 1, 0:out_dim]


# ---------------------------------------------------------------------------
# Host-side packing + wrapper
# ---------------------------------------------------------------------------
def pack_params(params):
    """Consolidate per-layer parameters into 3 kernel inputs.

    wblk : (H, NB*2*H) lane-dense slab  [w1_0 | w2_0 | w1_1 | w2_1 | ...]
    vecs : (2 + 4*NB + OUT + 1, H) slab of per-feature vectors:
           [g0, be0, g1s..., be1s..., g2s..., be2s..., wout^T rows, bout row]
    The pre-BN biases (b0/b1s/b2s) are intentionally NOT packed: train-mode BN
    cancels them exactly.
    """
    w0 = params["w0"]
    H = w0.shape[1]
    nb = params["w1s"].shape[0]
    out_dim = params["wout"].shape[1]

    wblk = jnp.concatenate(
        [jnp.concatenate([params["w1s"][i], params["w2s"][i]], axis=1)
         for i in range(nb)],
        axis=1)                                            # (H, nb*2*H)

    bout_row = jnp.pad(params["bout"].reshape(1, out_dim),
                       ((0, 0), (0, H - out_dim)))         # (1, H)

    vecs = jnp.concatenate([
        params["g0"], params["be0"],                       # rows 0, 1
        params["g1s"].reshape(nb, H),                      # rows 2 .. 2+nb-1
        params["be1s"].reshape(nb, H),
        params["g2s"].reshape(nb, H),
        params["be2s"].reshape(nb, H),
        params["wout"].T,                                  # out_dim rows
        bout_row,                                          # final row
    ], axis=0)

    return {"w0": w0, "wblk": wblk, "vecs": vecs}


@jax.jit
def custom_resnet_forward(x, packed):
    w0, wblk, vecs = packed["w0"], packed["wblk"], packed["vecs"]
    B, in_dim = x.shape
    H = w0.shape[1]
    nb = wblk.shape[1] // (2 * H)
    out_dim = vecs.shape[0] - (2 + 4 * nb) - 1

    kernel = functools.partial(_resnet_kernel,
                               num_blocks=nb, hidden=H, out_dim=out_dim)

    flops = 2 * B * in_dim * H + nb * 2 * (2 * B * H * H) + 2 * B * H * out_dim
    transcendentals = (2 * nb + 1) * H                      # one rsqrt per BN feature
    bytes_accessed = 4 * (x.size + w0.size + wblk.size + vecs.size + B * out_dim)

    vmem = pl.BlockSpec(memory_space=pltpu.MemorySpace.VMEM)
    return pl.pallas_call(
        kernel,
        out_shape=jax.ShapeDtypeStruct((B, out_dim), jnp.float32),
        in_specs=[vmem, vmem, vmem, vmem],
        out_specs=vmem,
        cost_estimate=pl.CostEstimate(flops=flops,
                                      transcendentals=transcendentals,
                                      bytes_accessed=bytes_accessed),
    )(x, w0, wblk, vecs)


# ---------------------------------------------------------------------------
# Parameter init (PyTorch-default-style) and pure-JAX reference
# ---------------------------------------------------------------------------
def init_params(key, input_dim, hidden_dim, output_dim):
    """Uniform +-1/sqrt(fan_in) for Linear weight/bias, gamma=1 / beta=0 for BN.
    Linear weights stored as (in_dim, out_dim) so y = x @ W + b."""
    def linear(k, fan_in, fan_out):
        kw, kb = jax.random.split(k)
        bound = 1.0 / jnp.sqrt(float(fan_in))
        w = jax.random.uniform(kw, (fan_in, fan_out), jnp.float32, -bound, bound)
        b = jax.random.uniform(kb, (1, fan_out), jnp.float32, -bound, bound)
        return w, b

    keys = jax.random.split(key, 2 + 2 * NUM_BLOCKS)
    w0, b0 = linear(keys[0], input_dim, hidden_dim)
    wout, bout = linear(keys[1], hidden_dim, output_dim)

    w1s, b1s, w2s, b2s = [], [], [], []
    for i in range(NUM_BLOCKS):
        w1, b1 = linear(keys[2 + 2 * i], hidden_dim, hidden_dim)
        w2, b2 = linear(keys[3 + 2 * i], hidden_dim, hidden_dim)
        w1s.append(w1); b1s.append(b1); w2s.append(w2); b2s.append(b2)

    ones = jnp.ones((NUM_BLOCKS, 1, hidden_dim), jnp.float32)
    zeros = jnp.zeros((NUM_BLOCKS, 1, hidden_dim), jnp.float32)

    return {
        "w0": w0, "b0": b0,
        "g0": jnp.ones((1, hidden_dim), jnp.float32),
        "be0": jnp.zeros((1, hidden_dim), jnp.float32),
        "w1s": jnp.stack(w1s), "b1s": jnp.stack(b1s), "g1s": ones, "be1s": zeros,
        "w2s": jnp.stack(w2s), "b2s": jnp.stack(b2s), "g2s": ones, "be2s": zeros,
        "wout": wout, "bout": bout,
    }


def _bn_ref(y, gamma, beta):
    mean = jnp.mean(y, axis=0, keepdims=True)
    var = jnp.mean((y - mean) ** 2, axis=0, keepdims=True)
    return (y - mean) * jax.lax.rsqrt(var + BN_EPS) * gamma + beta


def reference_forward(x, params):
    """Pure-JAX reference mirroring the PyTorch module exactly (biases included;
    train-mode BN cancels the pre-BN biases up to fp rounding)."""
    h = x @ params["w0"] + params["b0"]
    h = jnp.maximum(_bn_ref(h, params["g0"], params["be0"]), 0.0)
    for i in range(NUM_BLOCKS):
        y = h @ params["w1s"][i] + params["b1s"][i]
        y = jnp.maximum(_bn_ref(y, params["g1s"][i], params["be1s"][i]), 0.0)
        y = y @ params["w2s"][i] + params["b2s"][i]
        y = _bn_ref(y, params["g2s"][i], params["be2s"][i])
        h = jnp.maximum(y + h, 0.0)
    return h @ params["wout"] + params["bout"]


# ---------------------------------------------------------------------------
if __name__ == "__main__":
    # Small shapes consistent with the module: batch=8, input_dim=16, hidden=32, output=1
    B, INPUT_DIM, HIDDEN_DIM, OUTPUT_DIM = 8, 16, 32, 1

    key = jax.random.PRNGKey(0)
    k_x, k_p = jax.random.split(key)
    x = jax.random.normal(k_x, (B, INPUT_DIM), jnp.float32)
    params = init_params(k_p, INPUT_DIM, HIDDEN_DIM, OUTPUT_DIM)
    packed = pack_params(params)

    out = custom_resnet_forward(x, packed)
    out = jax.block_until_ready(out)

    ref = reference_forward(x, params)
    assert out.shape == (B, OUTPUT_DIM)
    assert jnp.allclose(out, ref, atol=1e-3, rtol=1e-3), "mismatch vs pure-JAX reference"

    print("KERNEL_OK")
</pallas_src>

<mosaic_0001>
module attributes {stable_mosaic.version = 11 : i64} {
  func.func @_resnet_kernel(%arg0: memref<8x16xf32, #tpu.memory_space<vmem>>, %arg1: memref<16x32xf32, #tpu.memory_space<vmem>>, %arg2: memref<32x320xf32, #tpu.memory_space<vmem>>, %arg3: memref<24x32xf32, #tpu.memory_space<vmem>>, %arg4: memref<8x1xf32, #tpu.memory_space<vmem>>) attributes {dimension_semantics = [], scalar_prefetch = 0 : i64, scratch_operands = 0 : i64, tpu.core_type = #tpu.core_type<tc>} {
    %c0 = arith.constant 0 : index
    %c0_0 = arith.constant 0 : index
    %0 = vector.load %arg0[%c0, %c0_0] : memref<8x16xf32, #tpu.memory_space<vmem>>, vector<8x16xf32>
    %c0_1 = arith.constant 0 : index
    %c0_2 = arith.constant 0 : index
    %1 = vector.load %arg1[%c0_1, %c0_2] : memref<16x32xf32, #tpu.memory_space<vmem>>, vector<16x32xf32>
    %cst = arith.constant dense<0.000000e+00> : vector<8x32xf32>
    %2 = tpu.matmul %0, %1, %cst {dimension_numbers = #tpu.dot_dimension_numbers<[1], [0], [0], [1], [0, 0, 1, 1], [], []>} : vector<8x16xf32>, vector<16x32xf32>, vector<8x32xf32> -> vector<8x32xf32>
    %c0_3 = arith.constant 0 : index
    %c0_4 = arith.constant 0 : index
    %3 = vector.load %arg3[%c0_3, %c0_4] : memref<24x32xf32, #tpu.memory_space<vmem>>, vector<1x32xf32>
    %c1 = arith.constant 1 : index
    %c0_5 = arith.constant 0 : index
    %4 = vector.load %arg3[%c1, %c0_5] : memref<24x32xf32, #tpu.memory_space<vmem>>, vector<1x32xf32>
    %cst_6 = arith.constant dense<0.000000e+00> : vector<32xf32>
    %5 = vector.multi_reduction <add>, %2, %cst_6 [0] : vector<8x32xf32> to vector<32xf32>
    %6 = vector.shape_cast %5 : vector<32xf32> to vector<1x32xf32>
    %cst_7 = arith.constant 8.000000e+00 : f32
    %7 = vector.broadcast %cst_7 : f32 to vector<1x32xf32>
    %8 = arith.divf %6, %7 : vector<1x32xf32>
    %9 = vector.broadcast %8 : vector<1x32xf32> to vector<8x32xf32>
    %10 = arith.subf %2, %9 : vector<8x32xf32>
    %11 = arith.mulf %10, %10 : vector<8x32xf32>
    %cst_8 = arith.constant dense<0.000000e+00> : vector<32xf32>
    %12 = vector.multi_reduction <add>, %11, %cst_8 [0] : vector<8x32xf32> to vector<32xf32>
    %13 = vector.shape_cast %12 : vector<32xf32> to vector<1x32xf32>
    %cst_9 = arith.constant 8.000000e+00 : f32
    %14 = vector.broadcast %cst_9 : f32 to vector<1x32xf32>
    %15 = arith.divf %13, %14 : vector<1x32xf32>
    %cst_10 = arith.constant 9.99999974E-6 : f32
    %16 = vector.broadcast %cst_10 : f32 to vector<1x32xf32>
    %17 = arith.addf %15, %16 : vector<1x32xf32>
    %18 = math.rsqrt %17 : vector<1x32xf32>
    %19 = arith.mulf %3, %18 : vector<1x32xf32>
    %20 = vector.broadcast %19 : vector<1x32xf32> to vector<8x32xf32>
    %21 = arith.mulf %2, %20 : vector<8x32xf32>
    %22 = arith.mulf %8, %19 : vector<1x32xf32>
    %23 = arith.subf %4, %22 : vector<1x32xf32>
    %24 = vector.broadcast %23 : vector<1x32xf32> to vector<8x32xf32>
    %25 = arith.addf %21, %24 : vector<8x32xf32>
    %cst_11 = arith.constant 0.000000e+00 : f32
    %26 = vector.broadcast %cst_11 : f32 to vector<8x32xf32>
    %27 = arith.maximumf %25, %26 : vector<8x32xf32>
    %c0_12 = arith.constant 0 : index
    %c0_13 = arith.constant 0 : index
    %28 = vector.load %arg2[%c0_12, %c0_13] : memref<32x320xf32, #tpu.memory_space<vmem>>, vector<32x32xf32>
    %cst_14 = arith.constant dense<0.000000e+00> : vector<8x32xf32>
    %29 = tpu.matmul %27, %28, %cst_14 {dimension_numbers = #tpu.dot_dimension_numbers<[1], [0], [0], [1], [0, 0, 1, 1], [], []>} : vector<8x32xf32>, vector<32x32xf32>, vector<8x32xf32> -> vector<8x32xf32>
    %c2 = arith.constant 2 : index
    %c0_15 = arith.constant 0 : index
    %30 = vector.load %arg3[%c2, %c0_15] : memref<24x32xf32, #tpu.memory_space<vmem>>, vector<1x32xf32>
    %c7 = arith.constant 7 : index
    %c0_16 = arith.constant 0 : index
    %31 = vector.load %arg3[%c7, %c0_16] : memref<24x32xf32, #tpu.memory_space<vmem>>, vector<1x32xf32>
    %cst_17 = arith.constant dense<0.000000e+00> : vector<32xf32>
    %32 = vector.multi_reduction <add>, %29, %cst_17 [0] : vector<8x32xf32> to vector<32xf32>
    %33 = vector.shape_cast %32 : vector<32xf32> to vector<1x32xf32>
    %cst_18 = arith.constant 8.000000e+00 : f32
    %34 = vector.broadcast %cst_18 : f32 to vector<1x32xf32>
    %35 = arith.divf %33, %34 : vector<1x32xf32>
    %36 = vector.broadcast %35 : vector<1x32xf32> to vector<8x32xf32>
    %37 = arith.subf %29, %36 : vector<8x32xf32>
    %38 = arith.mulf %37, %37 : vector<8x32xf32>
    %cst_19 = arith.constant dense<0.000000e+00> : vector<32xf32>
    %39 = vector.multi_reduction <add>, %38, %cst_19 [0] : vector<8x32xf32> to vector<32xf32>
    %40 = vector.shape_cast %39 : vector<32xf32> to vector<1x32xf32>
    %cst_20 = arith.constant 8.000000e+00 : f32
    %41 = vector.broadcast %cst_20 : f32 to vector<1x32xf32>
    %42 = arith.divf %40, %41 : vector<1x32xf32>
    %cst_21 = arith.constant 9.99999974E-6 : f32
    %43 = vector.broadcast %cst_21 : f32 to vector<1x32xf32>
    %44 = arith.addf %42, %43 : vector<1x32xf32>
    %45 = math.rsqrt %44 : vector<1x32xf32>
    %46 = arith.mulf %30, %45 : vector<1x32xf32>
    %47 = vector.broadcast %46 : vector<1x32xf32> to vector<8x32xf32>
    %48 = arith.mulf %29, %47 : vector<8x32xf32>
    %49 = arith.mulf %35, %46 : vector<1x32xf32>
    %50 = arith.subf %31, %49 : vector<1x32xf32>
    %51 = vector.broadcast %50 : vector<1x32xf32> to vector<8x32xf32>
    %52 = arith.addf %48, %51 : vector<8x32xf32>
    %cst_22 = arith.constant 0.000000e+00 : f32
    %53 = vector.broadcast %cst_22 : f32 to vector<8x32xf32>
    %54 = arith.maximumf %52, %53 : vector<8x32xf32>
    %c0_23 = arith.constant 0 : index
    %c32 = arith.constant 32 : index
    %55 = vector.load %arg2[%c0_23, %c32] : memref<32x320xf32, #tpu.memory_space<vmem>>, vector<32x32xf32>
    %cst_24 = arith.constant dense<0.000000e+00> : vector<8x32xf32>
    %56 = tpu.matmul %54, %55, %cst_24 {dimension_numbers = #tpu.dot_dimension_numbers<[1], [0], [0], [1], [0, 0, 1, 1], [], []>} : vector<8x32xf32>, vector<32x32xf32>, vector<8x32xf32> -> vector<8x32xf32>
    %c12 = arith.constant 12 : index
    %c0_25 = arith.constant 0 : index
    %57 = vector.load %arg3[%c12, %c0_25] : memref<24x32xf32, #tpu.memory_space<vmem>>, vector<1x32xf32>
    %c17 = arith.constant 17 : index
    %c0_26 = arith.constant 0 : index
    %58 = vector.load %arg3[%c17, %c0_26] : memref<24x32xf32, #tpu.memory_space<vmem>>, vector<1x32xf32>
    %cst_27 = arith.constant dense<0.000000e+00> : vector<32xf32>
    %59 = vector.multi_reduction <add>, %56, %cst_27 [0] : vector<8x32xf32> to vector<32xf32>
    %60 = vector.shape_cast %59 : vector<32xf32> to vector<1x32xf32>
    %cst_28 = arith.constant 8.000000e+00 : f32
    %61 = vector.broadcast %cst_28 : f32 to vector<1x32xf32>
    %62 = arith.divf %60, %61 : vector<1x32xf32>
    %63 = vector.broadcast %62 : vector<1x32xf32> to vector<8x32xf32>
    %64 = arith.subf %56, %63 : vector<8x32xf32>
    %65 = arith.mulf %64, %64 : vector<8x32xf32>
    %cst_29 = arith.constant dense<0.000000e+00> : vector<32xf32>
    %66 = vector.multi_reduction <add>, %65, %cst_29 [0] : vector<8x32xf32> to vector<32xf32>
    %67 = vector.shape_cast %66 : vector<32xf32> to vector<1x32xf32>
    %cst_30 = arith.constant 8.000000e+00 : f32
    %68 = vector.broadcast %cst_30 : f32 to vector<1x32xf32>
    %69 = arith.divf %67, %68 : vector<1x32xf32>
    %cst_31 = arith.constant 9.99999974E-6 : f32
    %70 = vector.broadcast %cst_31 : f32 to vector<1x32xf32>
    %71 = arith.addf %69, %70 : vector<1x32xf32>
    %72 = math.rsqrt %71 : vector<1x32xf32>
    %73 = arith.mulf %57, %72 : vector<1x32xf32>
    %74 = vector.broadcast %73 : vector<1x32xf32> to vector<8x32xf32>
    %75 = arith.mulf %56, %74 : vector<8x32xf32>
    %76 = arith.mulf %62, %73 : vector<1x32xf32>
    %77 = arith.subf %58, %76 : vector<1x32xf32>
    %78 = vector.broadcast %77 : vector<1x32xf32> to vector<8x32xf32>
    %79 = arith.addf %75, %78 : vector<8x32xf32>
    %80 = arith.addf %79, %27 : vector<8x32xf32>
    %cst_32 = arith.constant 0.000000e+00 : f32
    %81 = vector.broadcast %cst_32 : f32 to vector<8x32xf32>
    %82 = arith.maximumf %80, %81 : vector<8x32xf32>
    %c0_33 = arith.constant 0 : index
    %c64 = arith.constant 64 : index
    %83 = vector.load %arg2[%c0_33, %c64] : memref<32x320xf32, #tpu.memory_space<vmem>>, vector<32x32xf32>
    %cst_34 = arith.constant dense<0.000000e+00> : vector<8x32xf32>
    %84 = tpu.matmul %82, %83, %cst_34 {dimension_numbers = #tpu.dot_dimension_numbers<[1], [0], [0], [1], [0, 0, 1, 1], [], []>} : vector<8x32xf32>, vector<32x32xf32>, vector<8x32xf32> -> vector<8x32xf32>
    %c3 = arith.constant 3 : index
    %c0_35 = arith.constant 0 : index
    %85 = vector.load %arg3[%c3, %c0_35] : memref<24x32xf32, #tpu.memory_space<vmem>>, vector<1x32xf32>
    %c8 = arith.constant 8 : index
    %c0_36 = arith.constant 0 : index
    %86 = vector.load %arg3[%c8, %c0_36] : memref<24x32xf32, #tpu.memory_space<vmem>>, vector<1x32xf32>
    %cst_37 = arith.constant dense<0.000000e+00> : vector<32xf32>
    %87 = vector.multi_reduction <add>, %84, %cst_37 [0] : vector<8x32xf32> to vector<32xf32>
    %88 = vector.shape_cast %87 : vector<32xf32> to vector<1x32xf32>
    %cst_38 = arith.constant 8.000000e+00 : f32
    %89 = vector.broadcast %cst_38 : f32 to vector<1x32xf32>
    %90 = arith.divf %88, %89 : vector<1x32xf32>
    %91 = vector.broadcast %90 : vector<1x32xf32> to vector<8x32xf32>
    %92 = arith.subf %84, %91 : vector<8x32xf32>
    %93 = arith.mulf %92, %92 : vector<8x32xf32>
    %cst_39 = arith.constant dense<0.000000e+00> : vector<32xf32>
    %94 = vector.multi_reduction <add>, %93, %cst_39 [0] : vector<8x32xf32> to vector<32xf32>
    %95 = vector.shape_cast %94 : vector<32xf32> to vector<1x32xf32>
    %cst_40 = arith.constant 8.000000e+00 : f32
    %96 = vector.broadcast %cst_40 : f32 to vector<1x32xf32>
    %97 = arith.divf %95, %96 : vector<1x32xf32>
    %cst_41 = arith.constant 9.99999974E-6 : f32
    %98 = vector.broadcast %cst_41 : f32 to vector<1x32xf32>
    %99 = arith.addf %97, %98 : vector<1x32xf32>
    %100 = math.rsqrt %99 : vector<1x32xf32>
    %101 = arith.mulf %85, %100 : vector<1x32xf32>
    %102 = vector.broadcast %101 : vector<1x32xf32> to vector<8x32xf32>
    %103 = arith.mulf %84, %102 : vector<8x32xf32>
    %104 = arith.mulf %90, %101 : vector<1x32xf32>
    %105 = arith.subf %86, %104 : vector<1x32xf32>
    %106 = vector.broadcast %105 : vector<1x32xf32> to vector<8x32xf32>
    %107 = arith.addf %103, %106 : vector<8x32xf32>
    %cst_42 = arith.constant 0.000000e+00 : f32
    %108 = vector.broadcast %cst_42 : f32 to vector<8x32xf32>
    %109 = arith.maximumf %107, %108 : vector<8x32xf32>
    %c0_43 = arith.constant 0 : index
    %c96 = arith.constant 96 : index
    %110 = vector.load %arg2[%c0_43, %c96] : memref<32x320xf32, #tpu.memory_space<vmem>>, vector<32x32xf32>
    %cst_44 = arith.constant dense<0.000000e+00> : vector<8x32xf32>
    %111 = tpu.matmul %109, %110, %cst_44 {dimension_numbers = #tpu.dot_dimension_numbers<[1], [0], [0], [1], [0, 0, 1, 1], [], []>} : vector<8x32xf32>, vector<32x32xf32>, vector<8x32xf32> -> vector<8x32xf32>
    %c13 = arith.constant 13 : index
    %c0_45 = arith.constant 0 : index
    %112 = vector.load %arg3[%c13, %c0_45] : memref<24x32xf32, #tpu.memory_space<vmem>>, vector<1x32xf32>
    %c18 = arith.constant 18 : index
    %c0_46 = arith.constant 0 : index
    %113 = vector.load %arg3[%c18, %c0_46] : memref<24x32xf32, #tpu.memory_space<vmem>>, vector<1x32xf32>
    %cst_47 = arith.constant dense<0.000000e+00> : vector<32xf32>
    %114 = vector.multi_reduction <add>, %111, %cst_47 [0] : vector<8x32xf32> to vector<32xf32>
    %115 = vector.shape_cast %114 : vector<32xf32> to vector<1x32xf32>
    %cst_48 = arith.constant 8.000000e+00 : f32
    %116 = vector.broadcast %cst_48 : f32 to vector<1x32xf32>
    %117 = arith.divf %115, %116 : vector<1x32xf32>
    %118 = vector.broadcast %117 : vector<1x32xf32> to vector<8x32xf32>
    %119 = arith.subf %111, %118 : vector<8x32xf32>
    %120 = arith.mulf %119, %119 : vector<8x32xf32>
    %cst_49 = arith.constant dense<0.000000e+00> : vector<32xf32>
    %121 = vector.multi_reduction <add>, %120, %cst_49 [0] : vector<8x32xf32> to vector<32xf32>
    %122 = vector.shape_cast %121 : vector<32xf32> to vector<1x32xf32>
    %cst_50 = arith.constant 8.000000e+00 : f32
    %123 = vector.broadcast %cst_50 : f32 to vector<1x32xf32>
    %124 = arith.divf %122, %123 : vector<1x32xf32>
    %cst_51 = arith.constant 9.99999974E-6 : f32
    %125 = vector.broadcast %cst_51 : f32 to vector<1x32xf32>
    %126 = arith.addf %124, %125 : vector<1x32xf32>
    %127 = math.rsqrt %126 : vector<1x32xf32>
    %128 = arith.mulf %112, %127 : vector<1x32xf32>
    %129 = vector.broadcast %128 : vector<1x32xf32> to vector<8x32xf32>
    %130 = arith.mulf %111, %129 : vector<8x32xf32>
    %131 = arith.mulf %117, %128 : vector<1x32xf32>
    %132 = arith.subf %113, %131 : vector<1x32xf32>
    %133 = vector.broadcast %132 : vector<1x32xf32> to vector<8x32xf32>
    %134 = arith.addf %130, %133 : vector<8x32xf32>
    %135 = arith.addf %134, %82 : vector<8x32xf32>
    %cst_52 = arith.constant 0.000000e+00 : f32
    %136 = vector.broadcast %cst_52 : f32 to vector<8x32xf32>
    %137 = arith.maximumf %135, %136 : vector<8x32xf32>
    %c0_53 = arith.constant 0 : index
    %c128 = arith.constant 128 : index
    %138 = vector.load %arg2[%c0_53, %c128] : memref<32x320xf32, #tpu.memory_space<vmem>>, vector<32x32xf32>
    %cst_54 = arith.constant dense<0.000000e+00> : vector<8x32xf32>
    %139 = tpu.matmul %137, %138, %cst_54 {dimension_numbers = #tpu.dot_dimension_numbers<[1], [0], [0], [1], [0, 0, 1, 1], [], []>} : vector<8x32xf32>, vector<32x32xf32>, vector<8x32xf32> -> vector<8x32xf32>
    %c4 = arith.constant 4 : index
    %c0_55 = arith.constant 0 : index
    %140 = vector.load %arg3[%c4, %c0_55] : memref<24x32xf32, #tpu.memory_space<vmem>>, vector<1x32xf32>
    %c9 = arith.constant 9 : index
    %c0_56 = arith.constant 0 : index
    %141 = vector.load %arg3[%c9, %c0_56] : memref<24x32xf32, #tpu.memory_space<vmem>>, vector<1x32xf32>
    %cst_57 = arith.constant dense<0.000000e+00> : vector<32xf32>
    %142 = vector.multi_reduction <add>, %139, %cst_57 [0] : vector<8x32xf32> to vector<32xf32>
    %143 = vector.shape_cast %142 : vector<32xf32> to vector<1x32xf32>
    %cst_58 = arith.constant 8.000000e+00 : f32
    %144 = vector.broadcast %cst_58 : f32 to vector<1x32xf32>
    %145 = arith.divf %143, %144 : vector<1x32xf32>
    %146 = vector.broadcast %145 : vector<1x32xf32> to vector<8x32xf32>
    %147 = arith.subf %139, %146 : vector<8x32xf32>
    %148 = arith.mulf %147, %147 : vector<8x32xf32>
    %cst_59 = arith.constant dense<0.000000e+00> : vector<32xf32>
    %149 = vector.multi_reduction <add>, %148, %cst_59 [0] : vector<8x32xf32> to vector<32xf32>
    %150 = vector.shape_cast %149 : vector<32xf32> to vector<1x32xf32>
    %cst_60 = arith.constant 8.000000e+00 : f32
    %151 = vector.broadcast %cst_60 : f32 to vector<1x32xf32>
    %152 = arith.divf %150, %151 : vector<1x32xf32>
    %cst_61 = arith.constant 9.99999974E-6 : f32
    %153 = vector.broadcast %cst_61 : f32 to vector<1x32xf32>
    %154 = arith.addf %152, %153 : vector<1x32xf32>
    %155 = math.rsqrt %154 : vector<1x32xf32>
    %156 = arith.mulf %140, %155 : vector<1x32xf32>
    %157 = vector.broadcast %156 : vector<1x32xf32> to vector<8x32xf32>
    %158 = arith.mulf %139, %157 : vector<8x32xf32>
    %159 = arith.mulf %145, %156 : vector<1x32xf32>
    %160 = arith.subf %141, %159 : vector<1x32xf32>
    %161 = vector.broadcast %160 : vector<1x32xf32> to vector<8x32xf32>
    %162 = arith.addf %158, %161 : vector<8x32xf32>
    %cst_62 = arith.constant 0.000000e+00 : f32
    %163 = vector.broadcast %cst_62 : f32 to vector<8x32xf32>
    %164 = arith.maximumf %162, %163 : vector<8x32xf32>
    %c0_63 = arith.constant 0 : index
    %c160 = arith.constant 160 : index
    %165 = vector.load %arg2[%c0_63, %c160] : memref<32x320xf32, #tpu.memory_space<vmem>>, vector<32x32xf32>
    %cst_64 = arith.constant dense<0.000000e+00> : vector<8x32xf32>
    %166 = tpu.matmul %164, %165, %cst_64 {dimension_numbers = #tpu.dot_dimension_numbers<[1], [0], [0], [1], [0, 0, 1, 1], [], []>} : vector<8x32xf32>, vector<32x32xf32>, vector<8x32xf32> -> vector<8x32xf32>
    %c14 = arith.constant 14 : index
    %c0_65 = arith.constant 0 : index
    %167 = vector.load %arg3[%c14, %c0_65] : memref<24x32xf32, #tpu.memory_space<vmem>>, vector<1x32xf32>
    %c19 = arith.constant 19 : index
    %c0_66 = arith.constant 0 : index
    %168 = vector.load %arg3[%c19, %c0_66] : memref<24x32xf32, #tpu.memory_space<vmem>>, vector<1x32xf32>
    %cst_67 = arith.constant dense<0.000000e+00> : vector<32xf32>
    %169 = vector.multi_reduction <add>, %166, %cst_67 [0] : vector<8x32xf32> to vector<32xf32>
    %170 = vector.shape_cast %169 : vector<32xf32> to vector<1x32xf32>
    %cst_68 = arith.constant 8.000000e+00 : f32
    %171 = vector.broadcast %cst_68 : f32 to vector<1x32xf32>
    %172 = arith.divf %170, %171 : vector<1x32xf32>
    %173 = vector.broadcast %172 : vector<1x32xf32> to vector<8x32xf32>
    %174 = arith.subf %166, %173 : vector<8x32xf32>
    %175 = arith.mulf %174, %174 : vector<8x32xf32>
    %cst_69 = arith.constant dense<0.000000e+00> : vector<32xf32>
    %176 = vector.multi_reduction <add>, %175, %cst_69 [0] : vector<8x32xf32> to vector<32xf32>
    %177 = vector.shape_cast %176 : vector<32xf32> to vector<1x32xf32>
    %cst_70 = arith.constant 8.000000e+00 : f32
    %178 = vector.broadcast %cst_70 : f32 to vector<1x32xf32>
    %179 = arith.divf %177, %178 : vector<1x32xf32>
    %cst_71 = arith.constant 9.99999974E-6 : f32
    %180 = vector.broadcast %cst_71 : f32 to vector<1x32xf32>
    %181 = arith.addf %179, %180 : vector<1x32xf32>
    %182 = math.rsqrt %181 : vector<1x32xf32>
    %183 = arith.mulf %167, %182 : vector<1x32xf32>
    %184 = vector.broadcast %183 : vector<1x32xf32> to vector<8x32xf32>
    %185 = arith.mulf %166, %184 : vector<8x32xf32>
    %186 = arith.mulf %172, %183 : vector<1x32xf32>
    %187 = arith.subf %168, %186 : vector<1x32xf32>
    %188 = vector.broadcast %187 : vector<1x32xf32> to vector<8x32xf32>
    %189 = arith.addf %185, %188 : vector<8x32xf32>
    %190 = arith.addf %189, %137 : vector<8x32xf32>
    %cst_72 = arith.constant 0.000000e+00 : f32
    %191 = vector.broadcast %cst_72 : f32 to vector<8x32xf32>
    %192 = arith.maximumf %190, %191 : vector<8x32xf32>
    %c0_73 = arith.constant 0 : index
    %c192 = arith.constant 192 : index
    %193 = vector.load %arg2[%c0_73, %c192] : memref<32x320xf32, #tpu.memory_space<vmem>>, vector<32x32xf32>
    %cst_74 = arith.constant dense<0.000000e+00> : vector<8x32xf32>
    %194 = tpu.matmul %192, %193, %cst_74 {dimension_numbers = #tpu.dot_dimension_numbers<[1], [0], [0], [1], [0, 0, 1, 1], [], []>} : vector<8x32xf32>, vector<32x32xf32>, vector<8x32xf32> -> vector<8x32xf32>
    %c5 = arith.constant 5 : index
    %c0_75 = arith.constant 0 : index
    %195 = vector.load %arg3[%c5, %c0_75] : memref<24x32xf32, #tpu.memory_space<vmem>>, vector<1x32xf32>
    %c10 = arith.constant 10 : index
    %c0_76 = arith.constant 0 : index
    %196 = vector.load %arg3[%c10, %c0_76] : memref<24x32xf32, #tpu.memory_space<vmem>>, vector<1x32xf32>
    %cst_77 = arith.constant dense<0.000000e+00> : vector<32xf32>
    %197 = vector.multi_reduction <add>, %194, %cst_77 [0] : vector<8x32xf32> to vector<32xf32>
    %198 = vector.shape_cast %197 : vector<32xf32> to vector<1x32xf32>
    %cst_78 = arith.constant 8.000000e+00 : f32
    %199 = vector.broadcast %cst_78 : f32 to vector<1x32xf32>
    %200 = arith.divf %198, %199 : vector<1x32xf32>
    %201 = vector.broadcast %200 : vector<1x32xf32> to vector<8x32xf32>
    %202 = arith.subf %194, %201 : vector<8x32xf32>
    %203 = arith.mulf %202, %202 : vector<8x32xf32>
    %cst_79 = arith.constant dense<0.000000e+00> : vector<32xf32>
    %204 = vector.multi_reduction <add>, %203, %cst_79 [0] : vector<8x32xf32> to vector<32xf32>
    %205 = vector.shape_cast %204 : vector<32xf32> to vector<1x32xf32>
    %cst_80 = arith.constant 8.000000e+00 : f32
    %206 = vector.broadcast %cst_80 : f32 to vector<1x32xf32>
    %207 = arith.divf %205, %206 : vector<1x32xf32>
    %cst_81 = arith.constant 9.99999974E-6 : f32
    %208 = vector.broadcast %cst_81 : f32 to vector<1x32xf32>
    %209 = arith.addf %207, %208 : vector<1x32xf32>
    %210 = math.rsqrt %209 : vector<1x32xf32>
    %211 = arith.mulf %195, %210 : vector<1x32xf32>
    %212 = vector.broadcast %211 : vector<1x32xf32> to vector<8x32xf32>
    %213 = arith.mulf %194, %212 : vector<8x32xf32>
    %214 = arith.mulf %200, %211 : vector<1x32xf32>
    %215 = arith.subf %196, %214 : vector<1x32xf32>
    %216 = vector.broadcast %215 : vector<1x32xf32> to vector<8x32xf32>
    %217 = arith.addf %213, %216 : vector<8x32xf32>
    %cst_82 = arith.constant 0.000000e+00 : f32
    %218 = vector.broadcast %cst_82 : f32 to vector<8x32xf32>
    %219 = arith.maximumf %217, %218 : vector<8x32xf32>
    %c0_83 = arith.constant 0 : index
    %c224 = arith.constant 224 : index
    %220 = vector.load %arg2[%c0_83, %c224] : memref<32x320xf32, #tpu.memory_space<vmem>>, vector<32x32xf32>
    %cst_84 = arith.constant dense<0.000000e+00> : vector<8x32xf32>
    %221 = tpu.matmul %219, %220, %cst_84 {dimension_numbers = #tpu.dot_dimension_numbers<[1], [0], [0], [1], [0, 0, 1, 1], [], []>} : vector<8x32xf32>, vector<32x32xf32>, vector<8x32xf32> -> vector<8x32xf32>
    %c15 = arith.constant 15 : index
    %c0_85 = arith.constant 0 : index
    %222 = vector.load %arg3[%c15, %c0_85] : memref<24x32xf32, #tpu.memory_space<vmem>>, vector<1x32xf32>
    %c20 = arith.constant 20 : index
    %c0_86 = arith.constant 0 : index
    %223 = vector.load %arg3[%c20, %c0_86] : memref<24x32xf32, #tpu.memory_space<vmem>>, vector<1x32xf32>
    %cst_87 = arith.constant dense<0.000000e+00> : vector<32xf32>
    %224 = vector.multi_reduction <add>, %221, %cst_87 [0] : vector<8x32xf32> to vector<32xf32>
    %225 = vector.shape_cast %224 : vector<32xf32> to vector<1x32xf32>
    %cst_88 = arith.constant 8.000000e+00 : f32
    %226 = vector.broadcast %cst_88 : f32 to vector<1x32xf32>
    %227 = arith.divf %225, %226 : vector<1x32xf32>
    %228 = vector.broadcast %227 : vector<1x32xf32> to vector<8x32xf32>
    %229 = arith.subf %221, %228 : vector<8x32xf32>
    %230 = arith.mulf %229, %229 : vector<8x32xf32>
    %cst_89 = arith.constant dense<0.000000e+00> : vector<32xf32>
    %231 = vector.multi_reduction <add>, %230, %cst_89 [0] : vector<8x32xf32> to vector<32xf32>
    %232 = vector.shape_cast %231 : vector<32xf32> to vector<1x32xf32>
    %cst_90 = arith.constant 8.000000e+00 : f32
    %233 = vector.broadcast %cst_90 : f32 to vector<1x32xf32>
    %234 = arith.divf %232, %233 : vector<1x32xf32>
    %cst_91 = arith.constant 9.99999974E-6 : f32
    %235 = vector.broadcast %cst_91 : f32 to vector<1x32xf32>
    %236 = arith.addf %234, %235 : vector<1x32xf32>
    %237 = math.rsqrt %236 : vector<1x32xf32>
    %238 = arith.mulf %222, %237 : vector<1x32xf32>
    %239 = vector.broadcast %238 : vector<1x32xf32> to vector<8x32xf32>
    %240 = arith.mulf %221, %239 : vector<8x32xf32>
    %241 = arith.mulf %227, %238 : vector<1x32xf32>
    %242 = arith.subf %223, %241 : vector<1x32xf32>
    %243 = vector.broadcast %242 : vector<1x32xf32> to vector<8x32xf32>
    %244 = arith.addf %240, %243 : vector<8x32xf32>
    %245 = arith.addf %244, %192 : vector<8x32xf32>
    %cst_92 = arith.constant 0.000000e+00 : f32
    %246 = vector.broadcast %cst_92 : f32 to vector<8x32xf32>
    %247 = arith.maximumf %245, %246 : vector<8x32xf32>
    %c0_93 = arith.constant 0 : index
    %c256 = arith.constant 256 : index
    %248 = vector.load %arg2[%c0_93, %c256] : memref<32x320xf32, #tpu.memory_space<vmem>>, vector<32x32xf32>
    %cst_94 = arith.constant dense<0.000000e+00> : vector<8x32xf32>
    %249 = tpu.matmul %247, %248, %cst_94 {dimension_numbers = #tpu.dot_dimension_numbers<[1], [0], [0], [1], [0, 0, 1, 1], [], []>} : vector<8x32xf32>, vector<32x32xf32>, vector<8x32xf32> -> vector<8x32xf32>
    %c6 = arith.constant 6 : index
    %c0_95 = arith.constant 0 : index
    %250 = vector.load %arg3[%c6, %c0_95] : memref<24x32xf32, #tpu.memory_space<vmem>>, vector<1x32xf32>
    %c11 = arith.constant 11 : index
    %c0_96 = arith.constant 0 : index
    %251 = vector.load %arg3[%c11, %c0_96] : memref<24x32xf32, #tpu.memory_space<vmem>>, vector<1x32xf32>
    %cst_97 = arith.constant dense<0.000000e+00> : vector<32xf32>
    %252 = vector.multi_reduction <add>, %249, %cst_97 [0] : vector<8x32xf32> to vector<32xf32>
    %253 = vector.shape_cast %252 : vector<32xf32> to vector<1x32xf32>
    %cst_98 = arith.constant 8.000000e+00 : f32
    %254 = vector.broadcast %cst_98 : f32 to vector<1x32xf32>
    %255 = arith.divf %253, %254 : vector<1x32xf32>
    %256 = vector.broadcast %255 : vector<1x32xf32> to vector<8x32xf32>
    %257 = arith.subf %249, %256 : vector<8x32xf32>
    %258 = arith.mulf %257, %257 : vector<8x32xf32>
    %cst_99 = arith.constant dense<0.000000e+00> : vector<32xf32>
    %259 = vector.multi_reduction <add>, %258, %cst_99 [0] : vector<8x32xf32> to vector<32xf32>
    %260 = vector.shape_cast %259 : vector<32xf32> to vector<1x32xf32>
    %cst_100 = arith.constant 8.000000e+00 : f32
    %261 = vector.broadcast %cst_100 : f32 to vector<1x32xf32>
    %262 = arith.divf %260, %261 : vector<1x32xf32>
    %cst_101 = arith.constant 9.99999974E-6 : f32
    %263 = vector.broadcast %cst_101 : f32 to vector<1x32xf32>
    %264 = arith.addf %262, %263 : vector<1x32xf32>
    %265 = math.rsqrt %264 : vector<1x32xf32>
    %266 = arith.mulf %250, %265 : vector<1x32xf32>
    %267 = vector.broadcast %266 : vector<1x32xf32> to vector<8x32xf32>
    %268 = arith.mulf %249, %267 : vector<8x32xf32>
    %269 = arith.mulf %255, %266 : vector<1x32xf32>
    %270 = arith.subf %251, %269 : vector<1x32xf32>
    %271 = vector.broadcast %270 : vector<1x32xf32> to vector<8x32xf32>
    %272 = arith.addf %268, %271 : vector<8x32xf32>
    %cst_102 = arith.constant 0.000000e+00 : f32
    %273 = vector.broadcast %cst_102 : f32 to vector<8x32xf32>
    %274 = arith.maximumf %272, %273 : vector<8x32xf32>
    %c0_103 = arith.constant 0 : index
    %c288 = arith.constant 288 : index
    %275 = vector.load %arg2[%c0_103, %c288] : memref<32x320xf32, #tpu.memory_space<vmem>>, vector<32x32xf32>
    %cst_104 = arith.constant dense<0.000000e+00> : vector<8x32xf32>
    %276 = tpu.matmul %274, %275, %cst_104 {dimension_numbers = #tpu.dot_dimension_numbers<[1], [0], [0], [1], [0, 0, 1, 1], [], []>} : vector<8x32xf32>, vector<32x32xf32>, vector<8x32xf32> -> vector<8x32xf32>
    %c16 = arith.constant 16 : index
    %c0_105 = arith.constant 0 : index
    %277 = vector.load %arg3[%c16, %c0_105] : memref<24x32xf32, #tpu.memory_space<vmem>>, vector<1x32xf32>
    %c21 = arith.constant 21 : index
    %c0_106 = arith.constant 0 : index
    %278 = vector.load %arg3[%c21, %c0_106] : memref<24x32xf32, #tpu.memory_space<vmem>>, vector<1x32xf32>
    %cst_107 = arith.constant dense<0.000000e+00> : vector<32xf32>
    %279 = vector.multi_reduction <add>, %276, %cst_107 [0] : vector<8x32xf32> to vector<32xf32>
    %280 = vector.shape_cast %279 : vector<32xf32> to vector<1x32xf32>
    %cst_108 = arith.constant 8.000000e+00 : f32
    %281 = vector.broadcast %cst_108 : f32 to vector<1x32xf32>
    %282 = arith.divf %280, %281 : vector<1x32xf32>
    %283 = vector.broadcast %282 : vector<1x32xf32> to vector<8x32xf32>
    %284 = arith.subf %276, %283 : vector<8x32xf32>
    %285 = arith.mulf %284, %284 : vector<8x32xf32>
    %cst_109 = arith.constant dense<0.000000e+00> : vector<32xf32>
    %286 = vector.multi_reduction <add>, %285, %cst_109 [0] : vector<8x32xf32> to vector<32xf32>
    %287 = vector.shape_cast %286 : vector<32xf32> to vector<1x32xf32>
    %cst_110 = arith.constant 8.000000e+00 : f32
    %288 = vector.broadcast %cst_110 : f32 to vector<1x32xf32>
    %289 = arith.divf %287, %288 : vector<1x32xf32>
    %cst_111 = arith.constant 9.99999974E-6 : f32
    %290 = vector.broadcast %cst_111 : f32 to vector<1x32xf32>
    %291 = arith.addf %289, %290 : vector<1x32xf32>
    %292 = math.rsqrt %291 : vector<1x32xf32>
    %293 = arith.mulf %277, %292 : vector<1x32xf32>
    %294 = vector.broadcast %293 : vector<1x32xf32> to vector<8x32xf32>
    %295 = arith.mulf %276, %294 : vector<8x32xf32>
    %296 = arith.mulf %282, %293 : vector<1x32xf32>
    %297 = arith.subf %278, %296 : vector<1x32xf32>
    %298 = vector.broadcast %297 : vector<1x32xf32> to vector<8x32xf32>
    %299 = arith.addf %295, %298 : vector<8x32xf32>
    %300 = arith.addf %299, %247 : vector<8x32xf32>
    %cst_112 = arith.constant 0.000000e+00 : f32
    %301 = vector.broadcast %cst_112 : f32 to vector<8x32xf32>
    %302 = arith.maximumf %300, %301 : vector<8x32xf32>
    %c22 = arith.constant 22 : index
    %c0_113 = arith.constant 0 : index
    %303 = vector.load %arg3[%c22, %c0_113] : memref<24x32xf32, #tpu.memory_space<vmem>>, vector<1x32xf32>
    %304 = vector.broadcast %303 : vector<1x32xf32> to vector<8x32xf32>
    %305 = arith.mulf %302, %304 : vector<8x32xf32>
    %cst_114 = arith.constant dense<0.000000e+00> : vector<8xf32>
    %306 = vector.multi_reduction <add>, %305, %cst_114 [1] : vector<8x32xf32> to vector<8xf32>
    %307 = vector.shape_cast %306 : vector<8xf32> to vector<8x1xf32>
    %c23 = arith.constant 23 : index
    %c0_115 = arith.constant 0 : index
    %308 = vector.load %arg3[%c23, %c0_115] : memref<24x32xf32, #tpu.memory_space<vmem>>, vector<1x1xf32>
    %309 = vector.broadcast %308 : vector<1x1xf32> to vector<8x1xf32>
    %310 = arith.addf %307, %309 : vector<8x1xf32>
    %c0_116 = arith.constant 0 : index
    %c0_117 = arith.constant 0 : index
    %311 = vector.load %arg4[%c0_116, %c0_117] : memref<8x1xf32, #tpu.memory_space<vmem>>, vector<8x1xf32>
    tpu.vector_store %arg4[%c0_116, %c0_117], %310 {strides = array<i32>} : memref<8x1xf32, #tpu.memory_space<vmem>>, vector<8x1xf32>,
    return
  }
}

</mosaic_0001>

<llo_original>
// kernel: custom_resnet_forward.1
$region0: #{custom_resnet_forward.1}
  #allocation0 [shape = 'u32[]', space=smem, size = 0x4, offset = 0x4, fixed_abs, tag = 'smem constant byte address 0x4 - core index']
  #allocation1 [shape = 'u32[72,128]{1,0:T(1,128)}', space=vmem, size = 0x9000, scoped, tag = 'internal scratch']
  %s0 = inlined_call_operand.hbm [shape: f32[8,16], index: 0, kind: input, shape index: {}]
  %s1 = inlined_call_operand.hbm [shape: f32[16,32], index: 1, kind: input, shape index: {}]
  %s2 = inlined_call_operand.hbm [shape: f32[32,320], index: 2, kind: input, shape index: {}]
  %s3 = inlined_call_operand.hbm [shape: f32[24,32], index: 3, kind: input, shape index: {}]
  %s4 = inlined_call_operand.vmem [shape: f32[8,1], index: 4, kind: output, shape index: {}]
  %s5 = sld [smem:[#allocation0]]
  $region42: #{custom_resnet_forward.1} parent=0
    _
  %s7 = ssub.s32 1, %s5
  %s8 = scalar_select 0, %s7, %s5
  $region1: #{custom_resnet_forward.1} parent=0
    #allocation2 [shape = 'u8[4096]{0}', space=vmem, size = 0x1000, scoped, tag = 'input window, operand 0, single buffered']
    #allocation3 [shape = 's32[1]{0}', space=sflag, size = 0x4, scoped, tag = 'scoped memory for custom_resnet_forward.1']
    #allocation4 [shape = 'u8[8192]{0}', space=vmem, size = 0x2000, scoped, tag = 'input window, operand 1, single buffered']
    #allocation5 [shape = 's32[1]{0}', space=sflag, size = 0x4, scoped, tag = 'scoped memory for custom_resnet_forward.1']
    #allocation6 [shape = 'u8[49152]{0}', space=vmem, size = 0xc000, scoped, tag = 'input window, operand 2, single buffered']
    #allocation7 [shape = 'u8[12288]{0}', space=vmem, size = 0x3000, scoped, tag = 'input window, operand 3, single buffered']
    #allocation8 [shape = 's32[1]{0}', space=sflag, size = 0x4, scoped, tag = 'scoped memory for custom_resnet_forward.1']
    %9 = vsyncpa [#allocation3], 0
    %10 = vsyncpa [#allocation5], 0
    %11 = vsyncpa [#allocation8], 0
    // Predicated region
    $region2: #{custom_resnet_forward.1} parent=1 // pred_check
      _
    $region3: #{custom_resnet_forward.1} parent=1 // pred_check_branch
      %13 = sbr.rel (0) target = $region5
    $region4: #{custom_resnet_forward.1} parent=1 // pred_region
      %15 = vsyncadd [#allocation3], 0
      %s17 = sshll.u32 %s0, 4
      %s18 = int_to_ptr.hbm [resolvable:$true] %s17
      %s19 = sshll.u32 [#allocation2], 4
      %s20 = int_to_ptr.vmem [resolvable:$true] %s19
      %22 = dma.hbm_to_vmem [thread:$0]  %s18, 128, %s20, [#allocation3]
    $region5: #{custom_resnet_forward.1} parent=1 // pred_fallthru
      _
    // Predicated region
    $region6: #{custom_resnet_forward.1} parent=1 // pred_check
      _
    $region7: #{custom_resnet_forward.1} parent=1 // pred_check_branch
      %24 = sbr.rel (0) target = $region9
    $region8: #{custom_resnet_forward.1} parent=1 // pred_region
      %26 = vsyncadd [#allocation5], 0
      %s27 = sshll.u32 %s1, 4
      %s28 = int_to_ptr.hbm [resolvable:$true] %s27
      %s29 = sshll.u32 [#allocation4], 4
      %s30 = int_to_ptr.vmem [resolvable:$true] %s29
      %35 = dma.hbm_to_vmem [thread:$0]  %s28, 256, %s30, [#allocation5], 128, 128, 8
    $region9: #{custom_resnet_forward.1} parent=1 // pred_fallthru
      _
    // Predicated region
    $region10: #{custom_resnet_forward.1} parent=1 // pred_check
      _
    $region11: #{custom_resnet_forward.1} parent=1 // pred_check_branch
      %37 = sbr.rel (0) target = $region13
    $region12: #{custom_resnet_forward.1} parent=1 // pred_region
      %39 = vsyncadd [#allocation5], 0
      %s40 = sshll.u32 %s2, 4
      %s41 = int_to_ptr.hbm [resolvable:$true] %s40
      %s42 = sshll.u32 [#allocation6], 4
      %s43 = int_to_ptr.vmem [resolvable:$true] %s42
      %48 = dma.hbm_to_vmem [thread:$0]  %s41, 1536, %s43, [#allocation5], 384, 384, 24
    $region13: #{custom_resnet_forward.1} parent=1 // pred_fallthru
      _
    // Predicated region
    $region14: #{custom_resnet_forward.1} parent=1 // pred_check
      _
    $region15: #{custom_resnet_forward.1} parent=1 // pred_check_branch
      %50 = sbr.rel (0) target = $region17
    $region16: #{custom_resnet_forward.1} parent=1 // pred_region
      %52 = vsyncadd [#allocation8], 0
      %s53 = sshll.u32 %s3, 4
      %s54 = int_to_ptr.hbm [resolvable:$true] %s53
      %s55 = sshll.u32 [#allocation7], 4
      %s56 = int_to_ptr.vmem [resolvable:$true] %s55
      %61 = dma.hbm_to_vmem [thread:$0]  %s54, 384, %s56, [#allocation8], 128, 128, 8
    $region17: #{custom_resnet_forward.1} parent=1 // pred_fallthru
      _
    // Predicated region
    $region18: #{custom_resnet_forward.1} parent=1 // pred_check
      _
    $region19: #{custom_resnet_forward.1} parent=1 // pred_check_branch
      %63 = sbr.rel (0) target = $region21
    $region20: #{custom_resnet_forward.1} parent=1 // pred_region
      %65 = dma.done [#allocation3], 128
    $region21: #{custom_resnet_forward.1} parent=1 // pred_fallthru
      _
    // Predicated region
    $region22: #{custom_resnet_forward.1} parent=1 // pred_check
      _
    $region23: #{custom_resnet_forward.1} parent=1 // pred_check_branch
      %67 = sbr.rel (0) target = $region25
    $region24: #{custom_resnet_forward.1} parent=1 // pred_region
      %69 = dma.done [#allocation5], 256
    $region25: #{custom_resnet_forward.1} parent=1 // pred_fallthru
      _
    // Predicated region
    $region26: #{custom_resnet_forward.1} parent=1 // pred_check
      _
    $region27: #{custom_resnet_forward.1} parent=1 // pred_check_branch
      %71 = sbr.rel (0) target = $region29
    $region28: #{custom_resnet_forward.1} parent=1 // pred_region
      %73 = dma.done [#allocation5], 1536
    $region29: #{custom_resnet_forward.1} parent=1 // pred_fallthru
      _
    // Predicated region
    $region30: #{custom_resnet_forward.1} parent=1 // pred_check
      _
    $region31: #{custom_resnet_forward.1} parent=1 // pred_check_branch
      %75 = sbr.rel (0) target = $region33
    $region32: #{custom_resnet_forward.1} parent=1 // pred_region
      %77 = dma.done [#allocation8], 384
    $region33: #{custom_resnet_forward.1} parent=1 // pred_fallthru
      _
    %v78 = vld [vmem:[#allocation2] sm:$0xff]
    %v79 = vld [vmem:[#allocation4] sm:$0xff]
    %v80 = vld [vmem:[#allocation4 + $0x8] sm:$0xff]
    %vm81 = vcmask 130048
    %v83 = vsel %vm81, %v78, 0
    %85 = vmatpush.msra.mxu0 0.0
    %86 = vmatpush.msra.mxu0 0.0
    %87 = vmatpush.msra.mxu0 0.0
    %88 = vmatpush.msra.mxu0 0.0
    %89 = vmatpush.msra.mxu0 0.0
    %90 = vmatpush.msra.mxu0 0.0
    %91 = vmatpush.msra.mxu0 0.0
    %92 = vmatpush.msra.mxu0 0.0
    %93 = vmatpush.msra.mxu0 0.0
    %94 = vmatpush.msra.mxu0 0.0
    %95 = vmatpush.msra.mxu0 0.0
    %96 = vmatpush.msra.mxu0 0.0
    %97 = vmatpush.msra.mxu0 0.0
    %98 = vmatpush.msra.mxu0 0.0
    %99 = vmatpush.msra.mxu0 %v80
    %100 = vmatpush.msra.mxu0 %v79
    %101 = vmatmul.f32.gmra.mxu0 %v83
    %v102 = vpop.f32.mrf.mxu0
    %v103 = vadd.f32 0.0, %v102
    %104 = vdwg.mxu0
    %v105 = vld [vmem:[#allocation7] sm:$0x1]
    %v106 = vld [vmem:[#allocation7 + $0x1] sm:$0x1]
    %vm107 = vcmask 261120
    %v108 = vsel %vm107, %v103, 0.0
    %v109 = vrot.slane %v108, 4
    %v110 = vadd.f32 %v108, %v109
    %v111 = vrot.slane %v110, 2
    %v112 = vadd.f32 %v110, %v111
    %v113 = vrot.slane %v112, 1
    %v114 = vadd.f32 %v112, %v113
    %v115 = vrcp.pop 8.0
    %v116 = vmul.f32 8.0, %v115
    %v117 = vsub.f32 1.0, %v116
    %v118 = vmul.f32 %v115, %v117
    %v119 = vadd.f32 %v115, %v118
    %vm120 = vweird.f32 %v115
    %v121 = vsel %vm120, %v115, %v119
    %v122 = vmul.f32 %v114, %v121
    %v123 = vsub.f32 %v103, %v122
    %v124 = vmul.f32 %v123, %v123
    %v125 = vsel %vm107, %v124, 0.0
    %v126 = vrot.slane %v125, 4
    %v127 = vadd.f32 %v125, %v126
    %v128 = vrot.slane %v127, 2
    %v129 = vadd.f32 %v127, %v128
    %v130 = vrot.slane %v129, 1
    %v131 = vadd.f32 %v129, %v130
    %v132 = vmul.f32 %v131, %v121
    %v133 = vadd.f32 %v132, 1e-05
    %v134 = vrsqrt.pop %v133
    %v135 = vmul.f32 %v134, %v133
    %v136 = vmul.f32 %v135, %v134
    %v137 = vmul.f32 0.5, %v136
    %v138 = vsub.f32 1.5, %v137
    %v139 = vmul.f32 %v134, %v138
    %vm140 = vweird.f32 %v133
    %vm141 = vweird.f32 %v134
    %vm142 = vmor %vm140, %vm141
    %v143 = vsel %vm142, %v134, %v139
    %v144 = vmul.f32 %v105, %v143
    %v145 = vperm.slane %v144, 0
    %v146 = vmul.f32 %v103, %v145
    %v147 = vmul.f32 %v122, %v144
    %v148 = vsub.f32 %v106, %v147
    %v149 = vperm.slane %v148, 0
    %v150 = vadd.f32 %v146, %v149
    %v151 = vmax.f32 %v150, 0.0
    %v152 = vld [vmem:[#allocation6] sm:$0xff]
    %v153 = vld [vmem:[#allocation6 + $0x18] sm:$0xff]
    %v154 = vld [vmem:[#allocation6 + $0x30] sm:$0xff]
    %v155 = vld [vmem:[#allocation6 + $0x48] sm:$0xff]
    %v157 = vsel %vm107, %v151, 0
    %159 = vmatpush.msra.mxu0 0.0
    %160 = vmatpush.msra.mxu0 0.0
    %161 = vmatpush.msra.mxu0 0.0
    %162 = vmatpush.msra.mxu0 0.0
    %163 = vmatpush.msra.mxu0 0.0
    %164 = vmatpush.msra.mxu0 0.0
    %165 = vmatpush.msra.mxu0 0.0
    %166 = vmatpush.msra.mxu0 0.0
    %167 = vmatpush.msra.mxu0 0.0
    %168 = vmatpush.msra.mxu0 0.0
    %169 = vmatpush.msra.mxu0 0.0
    %170 = vmatpush.msra.mxu0 0.0
    %171 = vmatpush.msra.mxu0 %v155
    %172 = vmatpush.msra.mxu0 %v154
    %173 = vmatpush.msra.mxu0 %v153
    %174 = vmatpush.msra.mxu0 %v152
    %175 = vmatmul.f32.gmra.mxu0 %v157
    %v176 = vpop.f32.mrf.mxu0
    %v177 = vadd.f32 0.0, %v176
    %178 = vdwg.mxu0
    %v179 = vld [vmem:[#allocation7 + $0x2] sm:$0x1]
    %v180 = vld [vmem:[#allocation7 + $0x7] sm:$0x1]
    %v181 = vsel %vm107, %v177, 0.0
    %v182 = vrot.slane %v181, 4
    %v183 = vadd.f32 %v181, %v182
    %v184 = vrot.slane %v183, 2
    %v185 = vadd.f32 %v183, %v184
    %v186 = vrot.slane %v185, 1
    %v187 = vadd.f32 %v185, %v186
    %v188 = vmul.f32 %v187, %v121
    %v189 = vsub.f32 %v177, %v188
    %v190 = vmul.f32 %v189, %v189
    %v191 = vsel %vm107, %v190, 0.0
    %v192 = vrot.slane %v191, 4
    %v193 = vadd.f32 %v191, %v192
    %v194 = vrot.slane %v193, 2
    %v195 = vadd.f32 %v193, %v194
    %v196 = vrot.slane %v195, 1
    %v197 = vadd.f32 %v195, %v196
    %v198 = vmul.f32 %v197, %v121
    %v199 = vadd.f32 %v198, 1e-05
    %v200 = vrsqrt.pop %v199
    %v201 = vmul.f32 %v200, %v199
    %v202 = vmul.f32 %v201, %v200
    %v203 = vmul.f32 0.5, %v202
    %v204 = vsub.f32 1.5, %v203
    %v205 = vmul.f32 %v200, %v204
    %vm206 = vweird.f32 %v199
    %vm207 = vweird.f32 %v200
    %vm208 = vmor %vm206, %vm207
    %v209 = vsel %vm208, %v200, %v205
    %v210 = vmul.f32 %v179, %v209
    %v211 = vperm.slane %v210, 0
    %v212 = vmul.f32 %v177, %v211
    %v213 = vmul.f32 %v188, %v210
    %v214 = vsub.f32 %v180, %v213
    %v215 = vperm.slane %v214, 0
    %v216 = vadd.f32 %v212, %v215
    %v217 = vmax.f32 %v216, 0.0
    %222 = vrot.lane.b32.xlu0 %v152, 96
    %v223 = vpop.permute.xlu0 %222
    %224 = vrot.lane.b32.xlu0 %v153, 96
    %v225 = vpop.permute.xlu0 %224
    %226 = vrot.lane.b32.xlu0 %v154, 96
    %v227 = vpop.permute.xlu0 %226
    %228 = vrot.lane.b32.xlu0 %v155, 96
    %v229 = vpop.permute.xlu0 %228
    %v235 = vsel %vm107, %v217, 0
    %237 = vmatpush.msra.mxu0 0.0
    %238 = vmatpush.msra.mxu0 0.0
    %239 = vmatpush.msra.mxu0 0.0
    %240 = vmatpush.msra.mxu0 0.0
    %241 = vmatpush.msra.mxu0 0.0
    %242 = vmatpush.msra.mxu0 0.0
    %243 = vmatpush.msra.mxu0 0.0
    %244 = vmatpush.msra.mxu0 0.0
    %245 = vmatpush.msra.mxu0 0.0
    %246 = vmatpush.msra.mxu0 0.0
    %247 = vmatpush.msra.mxu0 0.0
    %248 = vmatpush.msra.mxu0 0.0
    %249 = vmatpush.msra.mxu0 %v229
    %250 = vmatpush.msra.mxu0 %v227
    %251 = vmatpush.msra.mxu0 %v225
    %252 = vmatpush.msra.mxu0 %v223
    %253 = vmatmul.f32.gmra.mxu0 %v235
    %v254 = vpop.f32.mrf.mxu0
    %v255 = vadd.f32 0.0, %v254
    %256 = vdwg.mxu0
    %v257 = vld [vmem:[#allocation7 + $0xc] sm:$0x1]
    %v258 = vld [vmem:[#allocation7 + $0x11] sm:$0x1]
    %v259 = vsel %vm107, %v255, 0.0
    %v260 = vrot.slane %v259, 4
    %v261 = vadd.f32 %v259, %v260
    %v262 = vrot.slane %v261, 2
    %v263 = vadd.f32 %v261, %v262
    %v264 = vrot.slane %v263, 1
    %v265 = vadd.f32 %v263, %v264
    %v266 = vmul.f32 %v265, %v121
    %v267 = vsub.f32 %v255, %v266
    %v268 = vmul.f32 %v267, %v267
    %v269 = vsel %vm107, %v268, 0.0
    %v270 = vrot.slane %v269, 4
    %v271 = vadd.f32 %v269, %v270
    %v272 = vrot.slane %v271, 2
    %v273 = vadd.f32 %v271, %v272
    %v274 = vrot.slane %v273, 1
    %v275 = vadd.f32 %v273, %v274
    %v276 = vmul.f32 %v275, %v121
    %v277 = vadd.f32 %v276, 1e-05
    %v278 = vrsqrt.pop %v277
    %v279 = vmul.f32 %v278, %v277
    %v280 = vmul.f32 %v279, %v278
    %v281 = vmul.f32 0.5, %v280
    %v282 = vsub.f32 1.5, %v281
    %v283 = vmul.f32 %v278, %v282
    %vm284 = vweird.f32 %v277
    %vm285 = vweird.f32 %v278
    %vm286 = vmor %vm284, %vm285
    %v287 = vsel %vm286, %v278, %v283
    %v288 = vmul.f32 %v257, %v287
    %v289 = vperm.slane %v288, 0
    %v290 = vmul.f32 %v255, %v289
    %v291 = vmul.f32 %v266, %v288
    %v292 = vsub.f32 %v258, %v291
    %v293 = vperm.slane %v292, 0
    %v294 = vadd.f32 %v290, %v293
    %v295 = vadd.f32 %v294, %v151
    %v296 = vmax.f32 %v295, 0.0
    %297 = vrot.lane.b32.xlu0 %v152, 64
    %v298 = vpop.permute.xlu0 %297
    %299 = vrot.lane.b32.xlu0 %v153, 64
    %v300 = vpop.permute.xlu0 %299
    %301 = vrot.lane.b32.xlu0 %v154, 64
    %v302 = vpop.permute.xlu0 %301
    %303 = vrot.lane.b32.xlu0 %v155, 64
    %v304 = vpop.permute.xlu0 %303
    %v310 = vsel %vm107, %v296, 0
    %312 = vmatpush.msra.mxu0 0.0
    %313 = vmatpush.msra.mxu0 0.0
    %314 = vmatpush.msra.mxu0 0.0
    %315 = vmatpush.msra.mxu0 0.0
    %316 = vmatpush.msra.mxu0 0.0
    %317 = vmatpush.msra.mxu0 0.0
    %318 = vmatpush.msra.mxu0 0.0
    %319 = vmatpush.msra.mxu0 0.0
    %320 = vmatpush.msra.mxu0 0.0
    %321 = vmatpush.msra.mxu0 0.0
    %322 = vmatpush.msra.mxu0 0.0
    %323 = vmatpush.msra.mxu0 0.0
    %324 = vmatpush.msra.mxu0 %v304
    %325 = vmatpush.msra.mxu0 %v302
    %326 = vmatpush.msra.mxu0 %v300
    %327 = vmatpush.msra.mxu0 %v298
    %328 = vmatmul.f32.gmra.mxu0 %v310
    %v329 = vpop.f32.mrf.mxu0
    %v330 = vadd.f32 0.0, %v329
    %331 = vdwg.mxu0
    %v332 = vld [vmem:[#allocation7 + $0x3] sm:$0x1]
    %v333 = vld [vmem:[#allocation7 + $0x8] sm:$0x1]
    %v334 = vsel %vm107, %v330, 0.0
    %v335 = vrot.slane %v334, 4
    %v336 = vadd.f32 %v334, %v335
    %v337 = vrot.slane %v336, 2
    %v338 = vadd.f32 %v336, %v337
    %v339 = vrot.slane %v338, 1
    %v340 = vadd.f32 %v338, %v339
    %v341 = vmul.f32 %v340, %v121
    %v342 = vsub.f32 %v330, %v341
    %v343 = vmul.f32 %v342, %v342
    %v344 = vsel %vm107, %v343, 0.0
    %v345 = vrot.slane %v344, 4
    %v346 = vadd.f32 %v344, %v345
    %v347 = vrot.slane %v346, 2
    %v348 = vadd.f32 %v346, %v347
    %v349 = vrot.slane %v348, 1
    %v350 = vadd.f32 %v348, %v349
    %v351 = vmul.f32 %v350, %v121
    %v352 = vadd.f32 %v351, 1e-05
    %v353 = vrsqrt.pop %v352
    %v354 = vmul.f32 %v353, %v352
    %v355 = vmul.f32 %v354, %v353
    %v356 = vmul.f32 0.5, %v355
    %v357 = vsub.f32 1.5, %v356
    %v358 = vmul.f32 %v353, %v357
    %vm359 = vweird.f32 %v352
    %vm360 = vweird.f32 %v353
    %vm361 = vmor %vm359, %vm360
    %v362 = vsel %vm361, %v353, %v358
    %v363 = vmul.f32 %v332, %v362
    %v364 = vperm.slane %v363, 0
    %v365 = vmul.f32 %v330, %v364
    %v366 = vmul.f32 %v341, %v363
    %v367 = vsub.f32 %v333, %v366
    %v368 = vperm.slane %v367, 0
    %v369 = vadd.f32 %v365, %v368
    %v370 = vmax.f32 %v369, 0.0
    %371 = vrot.lane.b32.xlu0 %v152, 32
    %v372 = vpop.permute.xlu0 %371
    %373 = vrot.lane.b32.xlu0 %v153, 32
    %v374 = vpop.permute.xlu0 %373
    %375 = vrot.lane.b32.xlu0 %v154, 32
    %v376 = vpop.permute.xlu0 %375
    %377 = vrot.lane.b32.xlu0 %v155, 32
    %v378 = vpop.permute.xlu0 %377
    %v384 = vsel %vm107, %v370, 0
    %386 = vmatpush.msra.mxu0 0.0
    %387 = vmatpush.msra.mxu0 0.0
    %388 = vmatpush.msra.mxu0 0.0
    %389 = vmatpush.msra.mxu0 0.0
    %390 = vmatpush.msra.mxu0 0.0
    %391 = vmatpush.msra.mxu0 0.0
    %392 = vmatpush.msra.mxu0 0.0
    %393 = vmatpush.msra.mxu0 0.0
    %394 = vmatpush.msra.mxu0 0.0
    %395 = vmatpush.msra.mxu0 0.0
    %396 = vmatpush.msra.mxu0 0.0
    %397 = vmatpush.msra.mxu0 0.0
    %398 = vmatpush.msra.mxu0 %v378
    %399 = vmatpush.msra.mxu0 %v376
    %400 = vmatpush.msra.mxu0 %v374
    %401 = vmatpush.msra.mxu0 %v372
    %402 = vmatmul.f32.gmra.mxu0 %v384
    %v403 = vpop.f32.mrf.mxu0
    %v404 = vadd.f32 0.0, %v403
    %405 = vdwg.mxu0
    %v406 = vld [vmem:[#allocation7 + $0xd] sm:$0x1]
    %v407 = vld [vmem:[#allocation7 + $0x12] sm:$0x1]
    %v408 = vsel %vm107, %v404, 0.0
    %v409 = vrot.slane %v408, 4
    %v410 = vadd.f32 %v408, %v409
    %v411 = vrot.slane %v410, 2
    %v412 = vadd.f32 %v410, %v411
    %v413 = vrot.slane %v412, 1
    %v414 = vadd.f32 %v412, %v413
    %v415 = vmul.f32 %v414, %v121
    %v416 = vsub.f32 %v404, %v415
    %v417 = vmul.f32 %v416, %v416
    %v418 = vsel %vm107, %v417, 0.0
    %v419 = vrot.slane %v418, 4
    %v420 = vadd.f32 %v418, %v419
    %v421 = vrot.slane %v420, 2
    %v422 = vadd.f32 %v420, %v421
    %v423 = vrot.slane %v422, 1
    %v424 = vadd.f32 %v422, %v423
    %v425 = vmul.f32 %v424, %v121
    %v426 = vadd.f32 %v425, 1e-05
    %v427 = vrsqrt.pop %v426
    %v428 = vmul.f32 %v427, %v426
    %v429 = vmul.f32 %v428, %v427
    %v430 = vmul.f32 0.5, %v429
    %v431 = vsub.f32 1.5, %v430
    %v432 = vmul.f32 %v427, %v431
    %vm433 = vweird.f32 %v426
    %vm434 = vweird.f32 %v427
    %vm435 = vmor %vm433, %vm434
    %v436 = vsel %vm435, %v427, %v432
    %v437 = vmul.f32 %v406, %v436
    %v438 = vperm.slane %v437, 0
    %v439 = vmul.f32 %v404, %v438
    %v440 = vmul.f32 %v415, %v437
    %v441 = vsub.f32 %v407, %v440
    %v442 = vperm.slane %v441, 0
    %v443 = vadd.f32 %v439, %v442
    %v444 = vadd.f32 %v443, %v296
    %v445 = vmax.f32 %v444, 0.0
    %v446 = vld [vmem:[#allocation6 + $0x8] sm:$0xff]
    %v447 = vld [vmem:[#allocation6 + $0x20] sm:$0xff]
    %v448 = vld [vmem:[#allocation6 + $0x38] sm:$0xff]
    %v449 = vld [vmem:[#allocation6 + $0x50] sm:$0xff]
    %v451 = vsel %vm107, %v445, 0
    %453 = vmatpush.msra.mxu0 0.0
    %454 = vmatpush.msra.mxu0 0.0
    %455 = vmatpush.msra.mxu0 0.0
    %456 = vmatpush.msra.mxu0 0.0
    %457 = vmatpush.msra.mxu0 0.0
    %458 = vmatpush.msra.mxu0 0.0
    %459 = vmatpush.msra.mxu0 0.0
    %460 = vmatpush.msra.mxu0 0.0
    %461 = vmatpush.msra.mxu0 0.0
    %462 = vmatpush.msra.mxu0 0.0
    %463 = vmatpush.msra.mxu0 0.0
    %464 = vmatpush.msra.mxu0 0.0
    %465 = vmatpush.msra.mxu0 %v449
    %466 = vmatpush.msra.mxu0 %v448
    %467 = vmatpush.msra.mxu0 %v447
    %468 = vmatpush.msra.mxu0 %v446
    %469 = vmatmul.f32.gmra.mxu0 %v451
    %v470 = vpop.f32.mrf.mxu0
    %v471 = vadd.f32 0.0, %v470
    %472 = vdwg.mxu0
    %v473 = vld [vmem:[#allocation7 + $0x4] sm:$0x1]
    %v474 = vld [vmem:[#allocation7 + $0x9] sm:$0x1]
    %v475 = vsel %vm107, %v471, 0.0
    %v476 = vrot.slane %v475, 4
    %v477 = vadd.f32 %v475, %v476
    %v478 = vrot.slane %v477, 2
    %v479 = vadd.f32 %v477, %v478
    %v480 = vrot.slane %v479, 1
    %v481 = vadd.f32 %v479, %v480
    %v482 = vmul.f32 %v481, %v121
    %v483 = vsub.f32 %v471, %v482
    %v484 = vmul.f32 %v483, %v483
    %v485 = vsel %vm107, %v484, 0.0
    %v486 = vrot.slane %v485, 4
    %v487 = vadd.f32 %v485, %v486
    %v488 = vrot.slane %v487, 2
    %v489 = vadd.f32 %v487, %v488
    %v490 = vrot.slane %v489, 1
    %v491 = vadd.f32 %v489, %v490
    %v492 = vmul.f32 %v491, %v121
    %v493 = vadd.f32 %v492, 1e-05
    %v494 = vrsqrt.pop %v493
    %v495 = vmul.f32 %v494, %v493
    %v496 = vmul.f32 %v495, %v494
    %v497 = vmul.f32 0.5, %v496
    %v498 = vsub.f32 1.5, %v497
    %v499 = vmul.f32 %v494, %v498
    %vm500 = vweird.f32 %v493
    %vm501 = vweird.f32 %v494
    %vm502 = vmor %vm500, %vm501
    %v503 = vsel %vm502, %v494, %v499
    %v504 = vmul.f32 %v473, %v503
    %v505 = vperm.slane %v504, 0
    %v506 = vmul.f32 %v471, %v505
    %v507 = vmul.f32 %v482, %v504
    %v508 = vsub.f32 %v474, %v507
    %v509 = vperm.slane %v508, 0
    %v510 = vadd.f32 %v506, %v509
    %v511 = vmax.f32 %v510, 0.0
    %516 = vrot.lane.b32.xlu0 %v446, 96
    %v517 = vpop.permute.xlu0 %516
    %518 = vrot.lane.b32.xlu0 %v447, 96
    %v519 = vpop.permute.xlu0 %518
    %520 = vrot.lane.b32.xlu0 %v448, 96
    %v521 = vpop.permute.xlu0 %520
    %522 = vrot.lane.b32.xlu0 %v449, 96
    %v523 = vpop.permute.xlu0 %522
    %v529 = vsel %vm107, %v511, 0
    %531 = vmatpush.msra.mxu0 0.0
    %532 = vmatpush.msra.mxu0 0.0
    %533 = vmatpush.msra.mxu0 0.0
    %534 = vmatpush.msra.mxu0 0.0
    %535 = vmatpush.msra.mxu0 0.0
    %536 = vmatpush.msra.mxu0 0.0
    %537 = vmatpush.msra.mxu0 0.0
    %538 = vmatpush.msra.mxu0 0.0
    %539 = vmatpush.msra.mxu0 0.0
    %540 = vmatpush.msra.mxu0 0.0
    %541 = vmatpush.msra.mxu0 0.0
    %542 = vmatpush.msra.mxu0 0.0
    %543 = vmatpush.msra.mxu0 %v523
    %544 = vmatpush.msra.mxu0 %v521
    %545 = vmatpush.msra.mxu0 %v519
    %546 = vmatpush.msra.mxu0 %v517
    %547 = vmatmul.f32.gmra.mxu0 %v529
    %v548 = vpop.f32.mrf.mxu0
    %v549 = vadd.f32 0.0, %v548
    %550 = vdwg.mxu0
    %v551 = vld [vmem:[#allocation7 + $0xe] sm:$0x1]
    %v552 = vld [vmem:[#allocation7 + $0x13] sm:$0x1]
    %v553 = vsel %vm107, %v549, 0.0
    %v554 = vrot.slane %v553, 4
    %v555 = vadd.f32 %v553, %v554
    %v556 = vrot.slane %v555, 2
    %v557 = vadd.f32 %v555, %v556
    %v558 = vrot.slane %v557, 1
    %v559 = vadd.f32 %v557, %v558
    %v560 = vmul.f32 %v559, %v121
    %v561 = vsub.f32 %v549, %v560
    %v562 = vmul.f32 %v561, %v561
    %v563 = vsel %vm107, %v562, 0.0
    %v564 = vrot.slane %v563, 4
    %v565 = vadd.f32 %v563, %v564
    %v566 = vrot.slane %v565, 2
    %v567 = vadd.f32 %v565, %v566
    %v568 = vrot.slane %v567, 1
    %v569 = vadd.f32 %v567, %v568
    %v570 = vmul.f32 %v569, %v121
    %v571 = vadd.f32 %v570, 1e-05
    %v572 = vrsqrt.pop %v571
    %v573 = vmul.f32 %v572, %v571
    %v574 = vmul.f32 %v573, %v572
    %v575 = vmul.f32 0.5, %v574
    %v576 = vsub.f32 1.5, %v575
    %v577 = vmul.f32 %v572, %v576
    %vm578 = vweird.f32 %v571
    %vm579 = vweird.f32 %v572
    %vm580 = vmor %vm578, %vm579
    %v581 = vsel %vm580, %v572, %v577
    %v582 = vmul.f32 %v551, %v581
    %v583 = vperm.slane %v582, 0
    %v584 = vmul.f32 %v549, %v583
    %v585 = vmul.f32 %v560, %v582
    %v586 = vsub.f32 %v552, %v585
    %v587 = vperm.slane %v586, 0
    %v588 = vadd.f32 %v584, %v587
    %v589 = vadd.f32 %v588, %v445
    %v590 = vmax.f32 %v589, 0.0
    %591 = vrot.lane.b32.xlu0 %v446, 64
    %v592 = vpop.permute.xlu0 %591
    %593 = vrot.lane.b32.xlu0 %v447, 64
    %v594 = vpop.permute.xlu0 %593
    %595 = vrot.lane.b32.xlu0 %v448, 64
    %v596 = vpop.permute.xlu0 %595
    %597 = vrot.lane.b32.xlu0 %v449, 64
    %v598 = vpop.permute.xlu0 %597
    %v604 = vsel %vm107, %v590, 0
    %606 = vmatpush.msra.mxu0 0.0
    %607 = vmatpush.msra.mxu0 0.0
    %608 = vmatpush.msra.mxu0 0.0
    %609 = vmatpush.msra.mxu0 0.0
    %610 = vmatpush.msra.mxu0 0.0
    %611 = vmatpush.msra.mxu0 0.0
    %612 = vmatpush.msra.mxu0 0.0
    %613 = vmatpush.msra.mxu0 0.0
    %614 = vmatpush.msra.mxu0 0.0
    %615 = vmatpush.msra.mxu0 0.0
    %616 = vmatpush.msra.mxu0 0.0
    %617 = vmatpush.msra.mxu0 0.0
    %618 = vmatpush.msra.mxu0 %v598
    %619 = vmatpush.msra.mxu0 %v596
    %620 = vmatpush.msra.mxu0 %v594
    %621 = vmatpush.msra.mxu0 %v592
    %622 = vmatmul.f32.gmra.mxu0 %v604
    %v623 = vpop.f32.mrf.mxu0
    %v624 = vadd.f32 0.0, %v623
    %625 = vdwg.mxu0
    %v626 = vld [vmem:[#allocation7 + $0x5] sm:$0x1]
    %v627 = vld [vmem:[#allocation7 + $0xa] sm:$0x1]
    %v628 = vsel %vm107, %v624, 0.0
    %v629 = vrot.slane %v628, 4
    %v630 = vadd.f32 %v628, %v629
    %v631 = vrot.slane %v630, 2
    %v632 = vadd.f32 %v630, %v631
    %v633 = vrot.slane %v632, 1
    %v634 = vadd.f32 %v632, %v633
    %v635 = vmul.f32 %v634, %v121
    %v636 = vsub.f32 %v624, %v635
    %v637 = vmul.f32 %v636, %v636
    %v638 = vsel %vm107, %v637, 0.0
    %v639 = vrot.slane %v638, 4
    %v640 = vadd.f32 %v638, %v639
    %v641 = vrot.slane %v640, 2
    %v642 = vadd.f32 %v640, %v641
    %v643 = vrot.slane %v642, 1
    %v644 = vadd.f32 %v642, %v643
    %v645 = vmul.f32 %v644, %v121
    %v646 = vadd.f32 %v645, 1e-05
    %v647 = vrsqrt.pop %v646
    %v648 = vmul.f32 %v647, %v646
    %v649 = vmul.f32 %v648, %v647
    %v650 = vmul.f32 0.5, %v649
    %v651 = vsub.f32 1.5, %v650
    %v652 = vmul.f32 %v647, %v651
    %vm653 = vweird.f32 %v646
    %vm654 = vweird.f32 %v647
    %vm655 = vmor %vm653, %vm654
    %v656 = vsel %vm655, %v647, %v652
    %v657 = vmul.f32 %v626, %v656
    %v658 = vperm.slane %v657, 0
    %v659 = vmul.f32 %v624, %v658
    %v660 = vmul.f32 %v635, %v657
    %v661 = vsub.f32 %v627, %v660
    %v662 = vperm.slane %v661, 0
    %v663 = vadd.f32 %v659, %v662
    %v664 = vmax.f32 %v663, 0.0
    %665 = vrot.lane.b32.xlu0 %v446, 32
    %v666 = vpop.permute.xlu0 %665
    %667 = vrot.lane.b32.xlu0 %v447, 32
    %v668 = vpop.permute.xlu0 %667
    %669 = vrot.lane.b32.xlu0 %v448, 32
    %v670 = vpop.permute.xlu0 %669
    %671 = vrot.lane.b32.xlu0 %v449, 32
    %v672 = vpop.permute.xlu0 %671
    %v678 = vsel %vm107, %v664, 0
    %680 = vmatpush.msra.mxu0 0.0
    %681 = vmatpush.msra.mxu0 0.0
    %682 = vmatpush.msra.mxu0 0.0
    %683 = vmatpush.msra.mxu0 0.0
    %684 = vmatpush.msra.mxu0 0.0
    %685 = vmatpush.msra.mxu0 0.0
    %686 = vmatpush.msra.mxu0 0.0
    %687 = vmatpush.msra.mxu0 0.0
    %688 = vmatpush.msra.mxu0 0.0
    %689 = vmatpush.msra.mxu0 0.0
    %690 = vmatpush.msra.mxu0 0.0
    %691 = vmatpush.msra.mxu0 0.0
    %692 = vmatpush.msra.mxu0 %v672
    %693 = vmatpush.msra.mxu0 %v670
    %694 = vmatpush.msra.mxu0 %v668
    %695 = vmatpush.msra.mxu0 %v666
    %696 = vmatmul.f32.gmra.mxu0 %v678
    %v697 = vpop.f32.mrf.mxu0
    %v698 = vadd.f32 0.0, %v697
    %699 = vdwg.mxu0
    %v700 = vld [vmem:[#allocation7 + $0xf] sm:$0x1]
    %v701 = vld [vmem:[#allocation7 + $0x14] sm:$0x1]
    %v702 = vsel %vm107, %v698, 0.0
    %v703 = vrot.slane %v702, 4
    %v704 = vadd.f32 %v702, %v703
    %v705 = vrot.slane %v704, 2
    %v706 = vadd.f32 %v704, %v705
    %v707 = vrot.slane %v706, 1
    %v708 = vadd.f32 %v706, %v707
    %v709 = vmul.f32 %v708, %v121
    %v710 = vsub.f32 %v698, %v709
    %v711 = vmul.f32 %v710, %v710
    %v712 = vsel %vm107, %v711, 0.0
    %v713 = vrot.slane %v712, 4
    %v714 = vadd.f32 %v712, %v713
    %v715 = vrot.slane %v714, 2
    %v716 = vadd.f32 %v714, %v715
    %v717 = vrot.slane %v716, 1
    %v718 = vadd.f32 %v716, %v717
    %v719 = vmul.f32 %v718, %v121
    %v720 = vadd.f32 %v719, 1e-05
    %v721 = vrsqrt.pop %v720
    %v722 = vmul.f32 %v721, %v720
    %v723 = vmul.f32 %v722, %v721
    %v724 = vmul.f32 0.5, %v723
    %v725 = vsub.f32 1.5, %v724
    %v726 = vmul.f32 %v721, %v725
    %vm727 = vweird.f32 %v720
    %vm728 = vweird.f32 %v721
    %vm729 = vmor %vm727, %vm728
    %v730 = vsel %vm729, %v721, %v726
    %v731 = vmul.f32 %v700, %v730
    %v732 = vperm.slane %v731, 0
    %v733 = vmul.f32 %v698, %v732
    %v734 = vmul.f32 %v709, %v731
    %v735 = vsub.f32 %v701, %v734
    %v736 = vperm.slane %v735, 0
    %v737 = vadd.f32 %v733, %v736
    %v738 = vadd.f32 %v737, %v590
    %v739 = vmax.f32 %v738, 0.0
    %v740 = vld [vmem:[#allocation6 + $0x10] sm:$0xff]
    %v741 = vld [vmem:[#allocation6 + $0x28] sm:$0xff]
    %v742 = vld [vmem:[#allocation6 + $0x40] sm:$0xff]
    %v743 = vld [vmem:[#allocation6 + $0x58] sm:$0xff]
    %v745 = vsel %vm107, %v739, 0
    %747 = vmatpush.msra.mxu0 0.0
    %748 = vmatpush.msra.mxu0 0.0
    %749 = vmatpush.msra.mxu0 0.0
    %750 = vmatpush.msra.mxu0 0.0
    %751 = vmatpush.msra.mxu0 0.0
    %752 = vmatpush.msra.mxu0 0.0
    %753 = vmatpush.msra.mxu0 0.0
    %754 = vmatpush.msra.mxu0 0.0
    %755 = vmatpush.msra.mxu0 0.0
    %756 = vmatpush.msra.mxu0 0.0
    %757 = vmatpush.msra.mxu0 0.0
    %758 = vmatpush.msra.mxu0 0.0
    %759 = vmatpush.msra.mxu0 %v743
    %760 = vmatpush.msra.mxu0 %v742
    %761 = vmatpush.msra.mxu0 %v741
    %762 = vmatpush.msra.mxu0 %v740
    %763 = vmatmul.f32.gmra.mxu0 %v745
    %v764 = vpop.f32.mrf.mxu0
    %v765 = vadd.f32 0.0, %v764
    %766 = vdwg.mxu0
    %v767 = vld [vmem:[#allocation7 + $0x6] sm:$0x1]
    %v768 = vld [vmem:[#allocation7 + $0xb] sm:$0x1]
    %v769 = vsel %vm107, %v765, 0.0
    %v770 = vrot.slane %v769, 4
    %v771 = vadd.f32 %v769, %v770
    %v772 = vrot.slane %v771, 2
    %v773 = vadd.f32 %v771, %v772
    %v774 = vrot.slane %v773, 1
    %v775 = vadd.f32 %v773, %v774
    %v776 = vmul.f32 %v775, %v121
    %v777 = vsub.f32 %v765, %v776
    %v778 = vmul.f32 %v777, %v777
    %v779 = vsel %vm107, %v778, 0.0
    %v780 = vrot.slane %v779, 4
    %v781 = vadd.f32 %v779, %v780
    %v782 = vrot.slane %v781, 2
    %v783 = vadd.f32 %v781, %v782
    %v784 = vrot.slane %v783, 1
    %v785 = vadd.f32 %v783, %v784
    %v786 = vmul.f32 %v785, %v121
    %v787 = vadd.f32 %v786, 1e-05
    %v788 = vrsqrt.pop %v787
    %v789 = vmul.f32 %v788, %v787
    %v790 = vmul.f32 %v789, %v788
    %v791 = vmul.f32 0.5, %v790
    %v792 = vsub.f32 1.5, %v791
    %v793 = vmul.f32 %v788, %v792
    %vm794 = vweird.f32 %v787
    %vm795 = vweird.f32 %v788
    %vm796 = vmor %vm794, %vm795
    %v797 = vsel %vm796, %v788, %v793
    %v798 = vmul.f32 %v767, %v797
    %v799 = vperm.slane %v798, 0
    %v800 = vmul.f32 %v765, %v799
    %v801 = vmul.f32 %v776, %v798
    %v802 = vsub.f32 %v768, %v801
    %v803 = vperm.slane %v802, 0
    %v804 = vadd.f32 %v800, %v803
    %v805 = vmax.f32 %v804, 0.0
    %810 = vrot.lane.b32.xlu0 %v740, 96
    %v811 = vpop.permute.xlu0 %810
    %812 = vrot.lane.b32.xlu0 %v741, 96
    %v813 = vpop.permute.xlu0 %812
    %814 = vrot.lane.b32.xlu0 %v742, 96
    %v815 = vpop.permute.xlu0 %814
    %816 = vrot.lane.b32.xlu0 %v743, 96
    %v817 = vpop.permute.xlu0 %816
    %v823 = vsel %vm107, %v805, 0
    %825 = vmatpush.msra.mxu0 0.0
    %826 = vmatpush.msra.mxu0 0.0
    %827 = vmatpush.msra.mxu0 0.0
    %828 = vmatpush.msra.mxu0 0.0
    %829 = vmatpush.msra.mxu0 0.0
    %830 = vmatpush.msra.mxu0 0.0
    %831 = vmatpush.msra.mxu0 0.0
    %832 = vmatpush.msra.mxu0 0.0
    %833 = vmatpush.msra.mxu0 0.0
    %834 = vmatpush.msra.mxu0 0.0
    %835 = vmatpush.msra.mxu0 0.0
    %836 = vmatpush.msra.mxu0 0.0
    %837 = vmatpush.msra.mxu0 %v817
    %838 = vmatpush.msra.mxu0 %v815
    %839 = vmatpush.msra.mxu0 %v813
    %840 = vmatpush.msra.mxu0 %v811
    %841 = vmatmul.f32.gmra.mxu0 %v823
    %v842 = vpop.f32.mrf.mxu0
    %v843 = vadd.f32 0.0, %v842
    %844 = vdwg.mxu0
    %v845 = vld [vmem:[#allocation7 + $0x10] sm:$0x1]
    %v846 = vld [vmem:[#allocation7 + $0x15] sm:$0x1]
    %v847 = vsel %vm107, %v843, 0.0
    %v848 = vrot.slane %v847, 4
    %v849 = vadd.f32 %v847, %v848
    %v850 = vrot.slane %v849, 2
    %v851 = vadd.f32 %v849, %v850
    %v852 = vrot.slane %v851, 1
    %v853 = vadd.f32 %v851, %v852
    %v854 = vmul.f32 %v853, %v121
    %v855 = vsub.f32 %v843, %v854
    %v856 = vmul.f32 %v855, %v855
    %v857 = vsel %vm107, %v856, 0.0
    %v858 = vrot.slane %v857, 4
    %v859 = vadd.f32 %v857, %v858
    %v860 = vrot.slane %v859, 2
    %v861 = vadd.f32 %v859, %v860
    %v862 = vrot.slane %v861, 1
    %v863 = vadd.f32 %v861, %v862
    %v864 = vmul.f32 %v863, %v121
    %v865 = vadd.f32 %v864, 1e-05
    %v866 = vrsqrt.pop %v865
    %v867 = vmul.f32 %v866, %v865
    %v868 = vmul.f32 %v867, %v866
    %v869 = vmul.f32 0.5, %v868
    %v870 = vsub.f32 1.5, %v869
    %v871 = vmul.f32 %v866, %v870
    %vm872 = vweird.f32 %v865
    %vm873 = vweird.f32 %v866
    %vm874 = vmor %vm872, %vm873
    %v875 = vsel %vm874, %v866, %v871
    %v876 = vmul.f32 %v845, %v875
    %v877 = vperm.slane %v876, 0
    %v878 = vmul.f32 %v843, %v877
    %v879 = vmul.f32 %v854, %v876
    %v880 = vsub.f32 %v846, %v879
    %v881 = vperm.slane %v880, 0
    %v882 = vadd.f32 %v878, %v881
    %v883 = vadd.f32 %v882, %v739
    %v884 = vmax.f32 %v883, 0.0
    %v885 = vld [vmem:[#allocation7 + $0x16] sm:$0x1]
    %v886 = vperm.slane %v885, 0
    %v887 = vmul.f32 %v884, %v886
    %v888 = vsel %vm107, %v887, 0.0
    %889 = vadd.xlane.f32.xlu0 %v888
    %v890 = vpop.xlane.xlu0 %889
    %v891 = vld [vmem:[#allocation7 + $0x17] sm:$0x1]
    %v892 = vperm.slane %v891, 0
    %v893 = vadd.f32 %v890, %v892
    %vm894 = vcmask 7168
    %895 = vst.msk [vmem:[%s4] sm:$0xff] %vm894, %v893
    // Predicated region
    $region34: #{custom_resnet_forward.1} parent=1 // pred_check
      _
    $region35: #{custom_resnet_forward.1} parent=1 // pred_check_branch
      %897 = sbr.rel (0) target = $region37
    $region36: #{custom_resnet_forward.1} parent=1 // pred_region
      _
    $region37: #{custom_resnet_forward.1} parent=1 // pred_fallthru
      _
    // Predicated region
    $region38: #{custom_resnet_forward.1} parent=1 // pred_check
      _
    $region39: #{custom_resnet_forward.1} parent=1 // pred_check_branch
      %899 = sbr.rel (0) target = $region41
    $region40: #{custom_resnet_forward.1} parent=1 // pred_region
      _
    $region41: #{custom_resnet_forward.1} parent=1 // pred_fallthru
      _
    %900 = vsyncpa [#allocation3], 1
    %901 = vsyncpa [#allocation5], 1
    %902 = vsyncpa [#allocation8], 1

</llo_original>
